<compile_context>
chip_gen: v5e
topology: v5e:2x2
jax: 0.10.0
libtpu: 0.0.40
codegen_flags: <defaults>
</compile_context>

<pallas_src>
import functools

import jax
import jax.numpy as jnp
from jax import lax
from jax.experimental import pallas as pl
from jax.experimental.pallas import tpu as pltpu


def _round_up(x, m):
    return (x + m - 1) // m * m


def prepare_ctc_params(w1, b1, w2, b2, *, compute_dtype=jnp.bfloat16):
    """Fuse + pad the neck-fc and CTC-fc parameters ONCE at model load.

    Collapses the two bias-affine Linears (no activation between them for the 'fc'
    neck + mid_channels=None CTC head):
        logits = x @ (w1 @ w2) + (b1 @ w2 + b2)
    The class dim is padded to a multiple of 128 (lane-dense MXU RHS); padded logits
    get a -1e30 bias so they softmax to ~0.  Weight is stored in `compute_dtype`
    (bf16) for the MXU; the bias stays f32 (added after the f32 accumulation).

    Returns (wf, bf, ncls) with wf: (C, NC_PAD) compute_dtype, bf: (1, NC_PAD) f32.
    """
    C, _hid = w1.shape
    ncls = w2.shape[1]
    nc_pad = _round_up(ncls, 128)
    pad = nc_pad - ncls

    wf = jnp.dot(w1.astype(jnp.float32), w2.astype(jnp.float32))        # (C, NCLS)
    bf = jnp.dot(b1.astype(jnp.float32), w2.astype(jnp.float32)) + b2   # (NCLS,)

    wf = jnp.pad(wf, ((0, 0), (0, pad))).astype(compute_dtype)          # (C, NC_PAD)
    bf = jnp.pad(bf, ((0, pad),), constant_values=-1e30)                # f32-safe pad
    bf = bf.astype(jnp.float32).reshape(1, nc_pad)
    return wf, bf, ncls


def _ctc_head_kernel(x_ref, w_ref, b_ref, out_ref, *, ncls, compute_dtype):
    """Fused: (Im2Seq-transposed) Linear(C -> NC_PAD) + bias -> softmax -> store NCLS.

    x_ref  : (TB, C, TW)      channel-major tiles of TB images' sequences (f32)
    w_ref  : (C, NC_PAD)      fused (neck fc @ ctc fc) weight, bf16, zero-padded classes
    b_ref  : (1, NC_PAD)      fused bias (f32), padded classes set to -1e30
    out_ref: (TB, TW, NCLS)   softmax probabilities over the REAL classes only
    """
    w = w_ref[...]
    b = b_ref[...]
    # Static unroll over the images packed into this block (TB is small).
    for i in range(x_ref.shape[0]):
        x = x_ref[i].astype(compute_dtype)                 # (C, TW) -> bf16 MXU feed
        # Transposed-LHS contraction: (C, TW)^T @ (C, NC_PAD) -> (TW, NC_PAD).
        # The MXU takes the transposed LHS natively, so Im2Seq costs nothing here.
        logits = lax.dot_general(
            x, w,
            dimension_numbers=(((0,), (0,)), ((), ())),
            preferred_element_type=jnp.float32,
        ) + b                                              # f32 logits

        # softmax over classes (PyTorch: F.softmax(predicts, dim=2)), all in f32.
        m = jnp.max(logits, axis=-1, keepdims=True)
        e = jnp.exp(logits - m)                            # padded classes -> ~0
        denom = jnp.sum(e, axis=-1, keepdims=True)
        inv = pl.reciprocal(denom, approx=True)            # EUP slot (free-ish)
        inv = inv * (2.0 - denom * inv)                    # one Newton step -> ~f32
        probs = e * inv

        # Store only the real classes: no padded HBM output, no wrapper slice.
        out_ref[i] = probs[:, :ncls].astype(out_ref.dtype)


@functools.partial(jax.jit, static_argnames=("ncls", "max_tile_w", "out_dtype"))
def multihead_forward(x_nchw, wf, bf, *, ncls, max_tile_w=512, out_dtype=jnp.float32):
    """Eval-mode MultiHead forward (returns ctc_out probabilities).

    x_nchw : (B, C, 1, W) float32 -- NCHW, height must be 1 (Im2Seq assert)
    wf, bf : fused params from prepare_ctc_params (called once at model load)
    returns: (B, W, ncls) softmax probabilities
    """
    B, C, H, W = x_nchw.shape
    assert H == 1, "Im2Seq requires input height == 1"
    Cw, nc_pad = wf.shape
    assert Cw == C

    # Im2Seq without a wrapper transpose: just drop H (contiguous reshape).
    x_bcw = x_nchw[:, :, 0, :]                                           # (B, C, W)

    # --- width tiling: 128-multiple tiles with a ragged last tile; full width if narrow.
    if W % 128 == 0:
        tile_w = min(W, max_tile_w)
    elif W < 128:
        tile_w = W
    else:
        tile_w = min(max_tile_w, 128 * (W // 128))
    n_w = pl.cdiv(W, tile_w)

    # --- images per grid step: amortize per-step overhead for narrow crops, but keep
    # >= 2 grid steps when possible so both v7x TensorCores get work.
    tb = max(1, min(B, 256 // max(tile_w, 1)))
    if tb > 1 and pl.cdiv(B, tb) * n_w < 2:
        tb = max(1, -(-B // 2))  # cdiv(B, 2)

    # --- explicit VMEM budget, sized for v7x's 64 MiB physical VMEM.
    x_it = jnp.dtype(x_nchw.dtype).itemsize
    o_it = jnp.dtype(out_dtype).itemsize
    w_it = jnp.dtype(wf.dtype).itemsize

    def vmem_needed(tb_, tw_):
        return (2 * tb_ * C * tw_ * x_it          # double-buffered x blocks
                + 2 * tb_ * tw_ * ncls * o_it     # double-buffered out blocks
                + 2 * C * nc_pad * w_it           # resident fused weight (bf16)
                + 2 * nc_pad * 4)                 # resident fused bias

    VMEM_BUDGET = 48 * 1024 * 1024
    while vmem_needed(tb, tile_w) > VMEM_BUDGET:
        if tile_w > 128 and tile_w % 128 == 0:
            tile_w = max(128, (tile_w // 2) // 128 * 128)
        elif tb > 1:
            tb = max(1, tb // 2)
        else:
            break
    n_w = pl.cdiv(W, tile_w)
    grid = (pl.cdiv(B, tb), n_w)

    vmem_limit = int(min(VMEM_BUDGET,
                         max(2 * vmem_needed(tb, tile_w) + (4 << 20), 32 << 20)))

    kernel = functools.partial(_ctc_head_kernel, ncls=ncls, compute_dtype=wf.dtype)

    cost = pl.CostEstimate(
        flops=2 * B * W * C * nc_pad,
        transcendentals=B * W * nc_pad,
        bytes_accessed=B * C * W * x_it + C * nc_pad * w_it + B * W * ncls * o_it,
    )

    # Ragged last blocks (B % tb or W % tile_w nonzero) read unspecified VMEM padding;
    # each softmax row is independent and out-of-bounds rows are dropped on store, so
    # valid outputs are unaffected.
    out = pl.pallas_call(
        kernel,
        out_shape=jax.ShapeDtypeStruct((B, W, ncls), out_dtype),
        grid_spec=pltpu.PrefetchScalarGridSpec(
            num_scalar_prefetch=0,
            grid=grid,
            in_specs=[
                pl.BlockSpec((tb, C, tile_w), lambda b, w: (b, 0, w)),
                # Weights/bias: constant index_map -> fetched once, kept resident.
                pl.BlockSpec((C, nc_pad), lambda b, w: (0, 0)),
                pl.BlockSpec((1, nc_pad), lambda b, w: (0, 0)),
            ],
            out_specs=pl.BlockSpec((tb, tile_w, ncls), lambda b, w: (b, w, 0)),
        ),
        compiler_params=pltpu.CompilerParams(
            dimension_semantics=("parallel", "parallel"),
            vmem_limit_bytes=vmem_limit,
        ),
        cost_estimate=cost,
    )(x_bcw, wf, bf)
    return out


def _reference_forward(x_nchw, w1, b1, w2, b2):
    """Plain-JAX reference mirroring the PyTorch eval forward (two separate f32 Linears)."""
    seq = jnp.transpose(x_nchw[:, :, 0, :], (0, 2, 1))           # (B, W, C)  Im2Seq
    enc = seq @ w1 + b1                                          # neck 'fc'  (ctc_encoder)
    logits = enc @ w2 + b2                                       # CTCHead fc
    return jax.nn.softmax(logits, axis=2)                        # F.softmax(dim=2)


if __name__ == "__main__":
    # Small, module-consistent shapes: in_channels=64, H=1 (required by Im2Seq),
    # W=16 (sequence length), neck hidden_size=48, CTC classes=40.
    B, C, H, W = 2, 64, 1, 16
    HID, NCLS = 48, 40

    key = jax.random.PRNGKey(0)
    kx, kw1, kb1, kw2, kb2 = jax.random.split(key, 5)

    x = jax.random.normal(kx, (B, C, H, W), dtype=jnp.float32)

    # Deterministic nn.Linear-style init (uniform +/- 1/sqrt(fan_in)).
    w1 = jax.random.uniform(kw1, (C, HID), jnp.float32, -1.0, 1.0) / jnp.sqrt(C)
    b1 = jax.random.uniform(kb1, (HID,), jnp.float32, -1.0, 1.0) / jnp.sqrt(C)
    w2 = jax.random.uniform(kw2, (HID, NCLS), jnp.float32, -1.0, 1.0) / jnp.sqrt(HID)
    b2 = jax.random.uniform(kb2, (NCLS,), jnp.float32, -1.0, 1.0) / jnp.sqrt(HID)

    # One-time (model-load) weight fusion + padding; not on the per-call path.
    wf, bf, ncls = prepare_ctc_params(w1, b1, w2, b2)
    wf, bf = jax.block_until_ready((wf, bf))

    ctc_out = multihead_forward(x, wf, bf, ncls=ncls)
    ctc_out = jax.block_until_ready(ctc_out)

    ref = _reference_forward(x, w1, b1, w2, b2)
    assert ctc_out.shape == (B, W, NCLS)
    assert bool(jnp.all(jnp.isfinite(ctc_out)))
    # bf16 MXU feed + fused weights change FP associativity vs the f32 reference;
    # a few e-4 absolute is expected on probabilities.
    max_err = float(jnp.max(jnp.abs(ctc_out - ref)))
    assert max_err < 5e-3, f"mismatch vs reference: max abs err {max_err}"
    row_sum_err = float(jnp.max(jnp.abs(jnp.sum(ctc_out, axis=-1) - 1.0)))
    assert row_sum_err < 1e-3, f"softmax rows not normalized: {row_sum_err}"

    print("KERNEL_OK")
</pallas_src>

<mosaic_0001>
module attributes {stable_mosaic.version = 11 : i64} {
  func.func @_ctc_head_kernel(%arg0: i32, %arg1: i32, %arg2: memref<1x64x16xf32, #tpu.memory_space<vmem>>, %arg3: memref<64x128xbf16, #tpu.memory_space<vmem>>, %arg4: memref<1x128xf32, #tpu.memory_space<vmem>>, %arg5: memref<1x16x40xf32, #tpu.memory_space<vmem>>) attributes {dimension_semantics = [#tpu.dimension_semantics<parallel>, #tpu.dimension_semantics<parallel>], iteration_bounds = array<i64: 2, 1>, scalar_prefetch = 0 : i64, scratch_operands = 0 : i64, tpu.core_type = #tpu.core_type<tc>, window_params = [{transform_indices = @transform_0, window_bounds = array<i64: 1, 64, 16>}, {pipeline_mode = #tpu.pipeline_mode<synchronous>, transform_indices = @transform_1, window_bounds = array<i64: 64, 128>}, {pipeline_mode = #tpu.pipeline_mode<synchronous>, transform_indices = @transform_2, window_bounds = array<i64: 1, 128>}, {transform_indices = @transform_3, window_bounds = array<i64: 1, 16, 40>}]} {
    %c0 = arith.constant 0 : index
    %c0_0 = arith.constant 0 : index
    %0 = vector.load %arg3[%c0, %c0_0] : memref<64x128xbf16, #tpu.memory_space<vmem>>, vector<64x128xbf16>
    %c0_1 = arith.constant 0 : index
    %c0_2 = arith.constant 0 : index
    %1 = vector.load %arg4[%c0_1, %c0_2] : memref<1x128xf32, #tpu.memory_space<vmem>>, vector<1x128xf32>
    %c0_3 = arith.constant 0 : index
    %c0_4 = arith.constant 0 : index
    %c0_5 = arith.constant 0 : index
    %2 = vector.load %arg2[%c0_3, %c0_4, %c0_5] : memref<1x64x16xf32, #tpu.memory_space<vmem>>, vector<1x64x16xf32>
    %3 = vector.shape_cast %2 : vector<1x64x16xf32> to vector<64x16xf32>
    %4 = arith.truncf %3 : vector<64x16xf32> to vector<64x16xbf16>
    %cst = arith.constant dense<0.000000e+00> : vector<16x128xf32>
    %5 = tpu.matmul %4, %0, %cst {dimension_numbers = #tpu.dot_dimension_numbers<[0], [0], [1], [1], [0, 1, 1, 1], [], []>} : vector<64x16xbf16>, vector<64x128xbf16>, vector<16x128xf32> -> vector<16x128xf32>
    %6 = vector.broadcast %1 : vector<1x128xf32> to vector<16x128xf32>
    %7 = arith.addf %5, %6 : vector<16x128xf32>
    %cst_6 = arith.constant dense<0xFF800000> : vector<16xf32>
    %8 = vector.multi_reduction <maximumf>, %7, %cst_6 [1] : vector<16x128xf32> to vector<16xf32>
    %9 = vector.shape_cast %8 : vector<16xf32> to vector<16x1xf32>
    %10 = vector.broadcast %9 : vector<16x1xf32> to vector<16x128xf32>
    %11 = arith.subf %7, %10 : vector<16x128xf32>
    %12 = math.exp %11 : vector<16x128xf32>
    %cst_7 = arith.constant dense<0.000000e+00> : vector<16xf32>
    %13 = vector.multi_reduction <add>, %12, %cst_7 [1] : vector<16x128xf32> to vector<16xf32>
    %14 = vector.shape_cast %13 : vector<16xf32> to vector<16x1xf32>
    %15 = tpu.reciprocal %14 {approx = true} : vector<16x1xf32> -> vector<16x1xf32>
    %16 = arith.mulf %14, %15 : vector<16x1xf32>
    %cst_8 = arith.constant 2.000000e+00 : f32
    %17 = vector.broadcast %cst_8 : f32 to vector<16x1xf32>
    %18 = arith.subf %17, %16 : vector<16x1xf32>
    %19 = arith.mulf %15, %18 : vector<16x1xf32>
    %20 = vector.broadcast %19 : vector<16x1xf32> to vector<16x128xf32>
    %21 = arith.mulf %12, %20 : vector<16x128xf32>
    %22 = vector.extract_strided_slice %21 {offsets = [0, 0], sizes = [16, 40], strides = [1, 1]} : vector<16x128xf32> to vector<16x40xf32>
    %c0_9 = arith.constant 0 : index
    %c0_10 = arith.constant 0 : index
    %c0_11 = arith.constant 0 : index
    %23 = vector.load %arg5[%c0_9, %c0_10, %c0_11] : memref<1x16x40xf32, #tpu.memory_space<vmem>>, vector<1x16x40xf32>
    %24 = vector.shape_cast %23 : vector<1x16x40xf32> to vector<16x40xf32>
    %25 = vector.shape_cast %22 : vector<16x40xf32> to vector<1x16x40xf32>
    tpu.vector_store %arg5[%c0_9, %c0_10, %c0_11], %25 {strides = array<i32>} : memref<1x16x40xf32, #tpu.memory_space<vmem>>, vector<1x16x40xf32>,
    return
  }
  func.func @transform_0(%arg0: i32, %arg1: i32) -> (i32, i32, i32) {
    %c0_i32 = arith.constant 0 : i32
    %c0_i32_0 = arith.constant 0 : i32
    return %arg0, %c0_i32, %arg1 : i32, i32, i32
  }
  func.func @transform_1(%arg0: i32, %arg1: i32) -> (i32, i32) {
    %c0_i32 = arith.constant 0 : i32
    %c0_i32_0 = arith.constant 0 : i32
    %c0_i32_1 = arith.constant 0 : i32
    return %c0_i32, %c0_i32_0 : i32, i32
  }
  func.func @transform_2(%arg0: i32, %arg1: i32) -> (i32, i32) {
    %c0_i32 = arith.constant 0 : i32
    %c0_i32_0 = arith.constant 0 : i32
    %c0_i32_1 = arith.constant 0 : i32
    return %c0_i32, %c0_i32_0 : i32, i32
  }
  func.func @transform_3(%arg0: i32, %arg1: i32) -> (i32, i32, i32) {
    %c0_i32 = arith.constant 0 : i32
    %c0_i32_0 = arith.constant 0 : i32
    return %arg0, %arg1, %c0_i32 : i32, i32, i32
  }
}

</mosaic_0001>

<llo_original>
// kernel: multihead_forward.1
$region0: #{multihead_forward.1}
  #allocation0 [shape = 'u32[]', space=smem, size = 0x4, offset = 0x4, fixed_abs, tag = 'smem constant byte address 0x4 - core index']
  #allocation1 [shape = 'u32[72,128]{1,0:T(1,128)}', space=vmem, size = 0x9000, scoped, tag = 'internal scratch']
  %s0 = inlined_call_operand.vmem [shape: f32[2,64,16], index: 0, kind: input, shape index: {}]
  %s1 = inlined_call_operand.vmem [shape: bf16[64,128], index: 1, kind: input, shape index: {}]
  %s2 = inlined_call_operand.vmem [shape: f32[1,128], index: 2, kind: input, shape index: {}]
  %s3 = inlined_call_operand.hbm [shape: f32[2,16,40], index: 3, kind: output, shape index: {}]
  %s4 = sld [smem:[#allocation0]]
  $region45: #{multihead_forward.1} parent=0
    _
  %s6 = ssub.s32 1, %s4
  %s7 = scalar_select 0, %s6, %s4
  $region1: #{multihead_forward.1} parent=0
    #allocation2 [shape = 'u8[16384]{0}', space=vmem, size = 0x4000, scoped, tag = 'output window, operand 0']
    #allocation3 [shape = 's32[2]{0}', space=sflag, size = 0x8, scoped, tag = 'scoped memory for multihead_forward.1']
    %8 = vsyncpa [#allocation3], 0
    %s9 = scalar_lea.sflag [#allocation3], 1
    %10 = vsyncpa %s9, 0
    loop: start=0, step=1, limit=4
    $region2: #{multihead_forward.1} parent=1 // loop_pre_header
      _
    $region3: #{multihead_forward.1} parent=1 // loop_header
      %s12 = sphi 0, %s16
      %p13 = scmp.ge.s32.totalorder %s12, 4
      %s19 = sphi 0, %s31
      %s20 = sphi 0, %s27
      %s21 = sphi 0, %s19
      %s22 = sphi 0, %s20
      %s23 = sphi 0, %s21
      %s24 = sphi 0, %s22
      %s36 = sphi 0, %s38
      %s39 = sphi 0, %s36
      %s40 = sphi 0, %s39
      %s56 = sphi 0, %s40
      %s60 = sphi 0, %s60
      %s62 = sphi 0, %s60
      %s63 = sphi 0, %s62
      %s77 = sphi 0, %s63
      %s81 = sphi 0, %s81
      %s83 = sphi 0, %s81
      %s84 = sphi 0, %s83
      %s98 = sphi 0, %s84
      %s106 = sphi 0, %s108
      %s109 = sphi 0, %s106
      %s110 = sphi 0, %s109
      %s126 = sphi 0, %s110
    $region4: #{multihead_forward.1} parent=1 // loop_header_branch
      %15 = sbr.rel (%p13) target = $region8
    $region5: #{multihead_forward.1} parent=1 // loop_body
      %s17 = ssub.s32 %s12, 1
      %s18 = ssub.s32 %s12, 2
      %s25 = sadd.s32 1, %s20
      %p26 = scmp.ge.s32.totalorder %s25, 1
      %s27 = scalar_select %p26, 0, %s25
      %s28 = sadd.s32 1, %s19
      %s29 = scalar_select %p26, %s28, %s19
      %p30 = scmp.ge.s32.totalorder %s29, 2
      %s31 = scalar_select %p30, 0, %s29
      %s32 = ssub.s32 %s19, %s31
      %s33 = ssub.s32 %s20, %s27
      %s34 = sor.u32 %s32, %s33
      %p35 = scmp.eq.s32.totalorder %s34, 0
      %s37 = sadd.s32 %s36, 1
      %s38 = scalar_select %p35, %s36, %s37
      %p41 = pneg %p35
      %p42 = scmp.eq.s32.totalorder %s12, 1
      %p43 = por %p41, %p42
      %p44 = scmp.ne.s32.totalorder %s36, %s39
      %p45 = scmp.eq.s32.totalorder %s12, 0
      %p46 = por %p44, %p45
      %p47 = scmp.ne.s32.totalorder %s36, %s39
      %p48 = scmp.eq.s32.totalorder %s17, 1
      %p49 = por %p47, %p48
      %p50 = scmp.ne.s32.totalorder %s39, %s40
      %p51 = scmp.eq.s32.totalorder %s17, 0
      %p52 = por %p50, %p51
      %p53 = scmp.ne.s32.totalorder %s39, %s40
      %p54 = scmp.eq.s32.totalorder %s18, 1
      %p55 = por %p53, %p54
      %p57 = scmp.ne.s32.totalorder %s40, %s56
      %p58 = scmp.eq.s32.totalorder %s18, 0
      %p59 = por %p57, %p58
      %s61 = sadd.s32 %s60, 1
      %p64 = scmp.eq.s32.totalorder %s12, 1
      %p65 = scmp.ne.s32.totalorder %s60, %s62
      %p66 = scmp.eq.s32.totalorder %s12, 0
      %p67 = por %p65, %p66
      %p68 = scmp.ne.s32.totalorder %s60, %s62
      %p69 = scmp.eq.s32.totalorder %s17, 1
      %p70 = por %p68, %p69
      %p71 = scmp.ne.s32.totalorder %s62, %s63
      %p72 = scmp.eq.s32.totalorder %s17, 0
      %p73 = por %p71, %p72
      %p74 = scmp.ne.s32.totalorder %s62, %s63
      %p75 = scmp.eq.s32.totalorder %s18, 1
      %p76 = por %p74, %p75
      %p78 = scmp.ne.s32.totalorder %s63, %s77
      %p79 = scmp.eq.s32.totalorder %s18, 0
      %p80 = por %p78, %p79
      %s82 = sadd.s32 %s81, 1
      %p85 = scmp.eq.s32.totalorder %s12, 1
      %p86 = scmp.ne.s32.totalorder %s81, %s83
      %p87 = scmp.eq.s32.totalorder %s12, 0
      %p88 = por %p86, %p87
      %p89 = scmp.ne.s32.totalorder %s81, %s83
      %p90 = scmp.eq.s32.totalorder %s17, 1
      %p91 = por %p89, %p90
      %p92 = scmp.ne.s32.totalorder %s83, %s84
      %p93 = scmp.eq.s32.totalorder %s17, 0
      %p94 = por %p92, %p93
      %p95 = scmp.ne.s32.totalorder %s83, %s84
      %p96 = scmp.eq.s32.totalorder %s18, 1
      %p97 = por %p95, %p96
      %p99 = scmp.ne.s32.totalorder %s84, %s98
      %p100 = scmp.eq.s32.totalorder %s18, 0
      %p101 = por %p99, %p100
      %s102 = ssub.s32 %s19, %s31
      %s103 = ssub.s32 %s20, %s27
      %s104 = sor.u32 %s102, %s103
      %p105 = scmp.eq.s32.totalorder %s104, 0
      %s107 = sadd.s32 %s106, 1
      %s108 = scalar_select %p105, %s106, %s107
      %p111 = pneg %p105
      %p112 = scmp.eq.s32.totalorder %s12, 1
      %p113 = por %p111, %p112
      %p114 = scmp.ne.s32.totalorder %s106, %s109
      %p115 = scmp.eq.s32.totalorder %s12, 0
      %p116 = por %p114, %p115
      %p117 = scmp.ne.s32.totalorder %s106, %s109
      %p118 = scmp.eq.s32.totalorder %s17, 1
      %p119 = por %p117, %p118
      %p120 = scmp.ne.s32.totalorder %s109, %s110
      %p121 = scmp.eq.s32.totalorder %s17, 0
      %p122 = por %p120, %p121
      %p123 = scmp.ne.s32.totalorder %s109, %s110
      %p124 = scmp.eq.s32.totalorder %s18, 1
      %p125 = por %p123, %p124
      %p127 = scmp.ne.s32.totalorder %s110, %s126
      %p128 = scmp.eq.s32.totalorder %s18, 0
      %p129 = por %p127, %p128
      %p130 = scmp.le.s32.totalorder 1, %s12
      %p131 = scmp.lt.s32.totalorder %s12, 3
      %p132 = pnand %p130, %p131
      %p133 = pneg %p132
      // Predicated region
      $region9: #{multihead_forward.1} parent=5 // pred_check
        _
      $region10: #{multihead_forward.1} parent=5 // pred_check_branch
        %135 = sbr.rel (%p132) target = $region12
      $region11: #{multihead_forward.1} parent=5 // pred_region
        %s136 = ssub.s32 %s12, 1
        // Predicated region
        $region13: #{multihead_forward.1} parent=11 // pred_check
          %p137 = pneg %p73
        $region14: #{multihead_forward.1} parent=11 // pred_check_branch
          %139 = sbr.rel (%p137) target = $region16
        $region15: #{multihead_forward.1} parent=11 // pred_region
          _
        $region16: #{multihead_forward.1} parent=11 // pred_fallthru
          _
        // Predicated region
        $region17: #{multihead_forward.1} parent=11 // pred_check
          %p140 = pneg %p94
        $region18: #{multihead_forward.1} parent=11 // pred_check_branch
          %142 = sbr.rel (%p140) target = $region20
        $region19: #{multihead_forward.1} parent=11 // pred_region
          _
        $region20: #{multihead_forward.1} parent=11 // pred_fallthru
          _
      $region12: #{multihead_forward.1} parent=5 // pred_fallthru
        _
      %p143 = scmp.lt.s32.totalorder %s12, 2
      // Predicated region
      $region21: #{multihead_forward.1} parent=5 // pred_check
        %p144 = pneg %p143
      $region22: #{multihead_forward.1} parent=5 // pred_check_branch
        %146 = sbr.rel (%p144) target = $region24
      $region23: #{multihead_forward.1} parent=5 // pred_region
        // Predicated region
        $region25: #{multihead_forward.1} parent=23 // pred_check
          %p147 = pneg %p46
        $region26: #{multihead_forward.1} parent=23 // pred_check_branch
          %149 = sbr.rel (%p147) target = $region28
        $region27: #{multihead_forward.1} parent=23 // pred_region
          %p150 = scmp.lt.s32.totalorder %s19, 1
          %s151 = scalar_select %p150, %s19, 1
          %p152 = scmp.lt.s32.totalorder %s20, 0
          %s153 = scalar_select %p152, %s20, 0
          %s154 = smul.addr %s151, 8
          %s155 = sadd.s32 %s153, %s154
          %s156 = smul.addr %s155, 8
          %s157 = scalar_lea.vmem %s0, %s156
        $region28: #{multihead_forward.1} parent=23 // pred_fallthru
          _
      $region24: #{multihead_forward.1} parent=5 // pred_fallthru
        _
      %p158 = scmp.le.s32.totalorder 1, %s12
      %p159 = scmp.lt.s32.totalorder %s12, 3
      %p160 = pnand %p158, %p159
      %p161 = pneg %p160
      // Predicated region
      $region29: #{multihead_forward.1} parent=5 // pred_check
        _
      $region30: #{multihead_forward.1} parent=5 // pred_check_branch
        %163 = sbr.rel (%p160) target = $region32
      $region31: #{multihead_forward.1} parent=5 // pred_region
        %s164 = ssub.s32 %s12, 1
        %p165 = scmp.lt.s32.totalorder %s21, 1
        %s166 = scalar_select %p165, %s21, 1
        %p167 = scmp.lt.s32.totalorder %s22, 0
        %s168 = scalar_select %p167, %s22, 0
        %s169 = smul.addr %s166, 8
        %s170 = sadd.s32 %s168, %s169
        %s171 = smul.addr %s170, 8
        %s172 = scalar_lea.vmem %s0, %s171
        %p173 = pneg %p52
        %p174 = pneg %p49
        %p175 = pneg %p73
        %p176 = pneg %p70
        %p177 = pneg %p94
        %p178 = pneg %p91
        %p179 = pneg %p122
        %p180 = pneg %p119
        %s181 = sand.u32 %s109, 1
        %s182 = scalar_lea.sflag [#allocation3], %s181
        %s183 = sand.u32 %s109, 1
        %s184 = smul.addr %s183, 16
        %s185 = scalar_lea.vmem [#allocation2], %s184
        %p186 = scmp.lt.s32.totalorder %s21, 1
        %s187 = scalar_select %p186, %s21, 1
        %p188 = scmp.lt.s32.totalorder %s22, 0
        %s189 = scalar_select %p188, %s22, 0
        %s190 = smul.addr %s187, 8
        %s191 = sadd.s32 %s189, %s190
        %s192 = smul.addr %s191, 8
        %s193 = scalar_lea.vmem %s0, %s192
        %s194 = smul.u32 2, %s22
        %v196 = vld [vmem:[%s1] sm:$0xf]
        %v197 = vld [vmem:[%s1 + $0x4] sm:$0xf]
        %v198 = vld [vmem:[%s1 + $0x8] sm:$0xf]
        %v199 = vld [vmem:[%s1 + $0xc] sm:$0xf]
        %v200 = vld [vmem:[%s1 + $0x10] sm:$0xf]
        %v201 = vld [vmem:[%s1 + $0x14] sm:$0xf]
        %v202 = vld [vmem:[%s1 + $0x18] sm:$0xf]
        %v203 = vld [vmem:[%s1 + $0x1c] sm:$0xf]
        %v204 = vld [vmem:[%s2] sm:$0x1]
        %v205 = vld [vmem:[%s193] sm:$0xff]
        %v206 = vld [vmem:[%s193 + $0x8] sm:$0xff]
        %v207 = vld [vmem:[%s193 + $0x10] sm:$0xff]
        %v208 = vld [vmem:[%s193 + $0x18] sm:$0xff]
        %v209 = vld [vmem:[%s193 + $0x20] sm:$0xff]
        %v210 = vld [vmem:[%s193 + $0x28] sm:$0xff]
        %v211 = vld [vmem:[%s193 + $0x30] sm:$0xff]
        %v212 = vld [vmem:[%s193 + $0x38] sm:$0xff]
        %v213 = vpack.c.bf16 %v206, %v205
        %v214 = vpack.c.bf16 %v208, %v207
        %v215 = vpack.c.bf16 %v210, %v209
        %v216 = vpack.c.bf16 %v212, %v211
        %v218 = vperm.slane %v204, 0
        %220 = vxpose.xlu0.c.b16.start [1/8] %v213, 128
        %221 = vxpose.xlu0.c.b16.cont [2/8] %v214, 128
        %222 = vxpose.xlu0.c.b16.cont [3/8] %v215, 128
        %223 = vxpose.xlu0.c.b16.cont [4/8] %v216, 128
        %224 = vxpose.xlu0.c.b16.cont [5/8] 0, 128
        %225 = vxpose.xlu0.c.b16.cont [6/8] 0, 128
        %226 = vxpose.xlu0.c.b16.cont [7/8] 0, 128
        %227 = vxpose.xlu0.c.b16.end [8/8] 0, 128
        %v228 = vpop.trf.xlu0
        %v229 = vpop.trf.xlu0
        %v230 = vpop.trf.xlu0
        %v231 = vpop.trf.xlu0
        %v232 = vpop.trf.xlu0
        %v233 = vpop.trf.xlu0
        %v234 = vpop.trf.xlu0
        %v235 = vpop.trf.xlu0
        %v244 = vunpack.c.l.b16 %v196
        %v245 = vunpack.c.l.b16 %v197
        %v246 = vunpack.c.l.b16 %v198
        %v247 = vunpack.c.l.b16 %v199
        %v248 = vunpack.c.l.b16 %v200
        %v249 = vunpack.c.l.b16 %v201
        %v250 = vunpack.c.l.b16 %v202
        %v251 = vunpack.c.l.b16 %v203
        %v252 = vpack.c.b16 %v245, %v244
        %v253 = vpack.c.b16 %v247, %v246
        %v254 = vpack.c.b16 %v249, %v248
        %v255 = vpack.c.b16 %v251, %v250
        %vm260 = vcmask 523264
        %v262 = vsel %vm260, %v228, 0
        %264 = vmatpush.bf16.msra.mxu0 0
        %265 = vmatpush.bf16.msra.mxu0 0
        %266 = vmatpush.bf16.msra.mxu0 0
        %267 = vmatpush.bf16.msra.mxu0 0
        %268 = vmatpush.bf16.msra.mxu0 %v255
        %269 = vmatpush.bf16.msra.mxu0 %v254
        %270 = vmatpush.bf16.msra.mxu0 %v253
        %271 = vmatpush.bf16.msra.mxu0 %v252
        %272 = vmatmul.bf16.gmra.mxu0 %v262
        %v273 = vpop.f32.mrf.mxu0
        %v274 = vadd.f32 %v218, %v273
        %v275 = vpop.f32.mrf.mxu0
        %v276 = vadd.f32 %v218, %v275
        %277 = vdwg.mxu0
        %278 = vmax.xlane.f32.xlu0 %v274
        %v279 = vpop.xlane.xlu0 %278
        %280 = vmax.xlane.f32.xlu0 %v276
        %v281 = vpop.xlane.xlu0 %280
        %v282 = vsub.f32 %v274, %v279
        %v283 = vsub.f32 %v276, %v281
        %v284 = vmul.f32 %v282, 1.442695
        %v285 = vpow.pop %v284
        %v286 = vmul.f32 %v283, 1.442695
        %v287 = vpow.pop %v286
        %288 = vadd.xlane.f32.xlu0 %v285
        %v289 = vpop.xlane.xlu0 %288
        %290 = vadd.xlane.f32.xlu0 %v287
        %v291 = vpop.xlane.xlu0 %290
        %v292 = vrcp.pop %v289
        %v293 = vrcp.pop %v291
        %v294 = vmul.f32 %v289, %v292
        %v295 = vmul.f32 %v291, %v293
        %v296 = vsub.f32 2.0, %v294
        %v297 = vsub.f32 2.0, %v295
        %v298 = vmul.f32 %v292, %v296
        %v299 = vmul.f32 %v293, %v297
        %v300 = vmul.f32 %v285, %v298
        %v301 = vmul.f32 %v287, %v299
        %vm302 = vcmask 326656
        %303 = vst.msk [vmem:[%s185] sm:$0xff] %vm302, %v300
        %304 = vst.msk [vmem:[%s185 + $0x8] sm:$0xff] %vm302, %v301
        %s305 = sand.u32 %s109, 1
        %s306 = scalar_lea.sflag [#allocation3], %s305
        %s307 = sand.u32 %s109, 1
        %s308 = smul.addr %s307, 16
        %s309 = scalar_lea.vmem [#allocation2], %s308
        // Predicated region
        $region33: #{multihead_forward.1} parent=31 // pred_check
          %p310 = pneg %p119
        $region34: #{multihead_forward.1} parent=31 // pred_check_branch
          %312 = sbr.rel (%p310) target = $region36
        $region35: #{multihead_forward.1} parent=31 // pred_region
          %s313 = smul.u32 2, %s22
          %315 = vsyncadd %s306, 0
          %s316 = smul.addr %s21, 2
          %s317 = sadd.s32 %s313, %s316
          %s318 = smul.addr %s317, 8
          %s319 = scalar_lea.hbm %s3, %s318
          %s320 = sshll.u32 %s309, 4
          %s321 = int_to_ptr.vmem [resolvable:$true] %s320
          %s322 = sshll.u32 %s319, 4
          %s323 = int_to_ptr.hbm [resolvable:$true] %s322
          %328 = dma.vmem_to_hbm [thread:$0]  %s321, 256, %s323, %s306, 128, 128, 8
        $region36: #{multihead_forward.1} parent=31 // pred_fallthru
          _
      $region32: #{multihead_forward.1} parent=5 // pred_fallthru
        _
      %p329 = scmp.le.s32.totalorder 2, %s12
      // Predicated region
      $region37: #{multihead_forward.1} parent=5 // pred_check
        %p330 = pneg %p329
      $region38: #{multihead_forward.1} parent=5 // pred_check_branch
        %332 = sbr.rel (%p330) target = $region40
      $region39: #{multihead_forward.1} parent=5 // pred_region
        %s333 = ssub.s32 %s12, 2
        // Predicated region
        $region41: #{multihead_forward.1} parent=39 // pred_check
          %p334 = pneg %p125
        $region42: #{multihead_forward.1} parent=39 // pred_check_branch
          %336 = sbr.rel (%p334) target = $region44
        $region43: #{multihead_forward.1} parent=39 // pred_region
          %s337 = sand.u32 %s110, 1
          %s338 = scalar_lea.sflag [#allocation3], %s337
          %s339 = sand.u32 %s110, 1
          %s340 = smul.addr %s339, 16
          %s341 = scalar_lea.vmem [#allocation2], %s340
          %343 = dma.done %s338, 256
        $region44: #{multihead_forward.1} parent=39 // pred_fallthru
          _
      $region40: #{multihead_forward.1} parent=5 // pred_fallthru
        _
    $region6: #{multihead_forward.1} parent=1 // loop_footer
      %s16 = sadd.s32 1, %s12
    $region7: #{multihead_forward.1} parent=1 // loop_footer_branch
      %11 = sbr.rel target = $region3
    $region8: #{multihead_forward.1} parent=1 // loop_exit
      _
    %344 = vsyncpa [#allocation3], 1
    %s345 = scalar_lea.sflag [#allocation3], 1
    %346 = vsyncpa %s345, 1

</llo_original>
